<compile_context>
chip_gen: v6e
topology: v6e:2x2x1
jax: 0.10.0
libtpu: 0.0.40
codegen_flags: <defaults>
</compile_context>

<pallas_src>
import functools

import jax
import jax.numpy as jnp
from jax.experimental import pallas as pl
from jax.experimental.pallas import tpu as pltpu


def _round_up(n, m):
    return ((n + m - 1) // m) * m


def _mlp_kernel(x_ref, w1_ref, b1_ref, w2_ref, b2_ref, o_ref, acc_ref, *, h_chunk):
    """y = relu(x @ W1 + b1) @ W2 + b2, chunked over the hidden dimension.

    x_ref:  [TB, Ip] bf16 (batch tile)     w1_ref: [Ip, Hp] bf16 (VMEM-resident)
    b1_ref: [1,  Hp] f32                   w2_ref: [Hp, Op] bf16 (VMEM-resident)
    b2_ref: [1,  Op] f32                   o_ref:  [TB, Op] out dtype
    acc_ref:[TB, Op] f32 scratch accumulator
    """
    n_chunks = w1_ref.shape[1] // h_chunk
    acc_ref[...] = jnp.zeros_like(acc_ref)

    @pl.loop(0, n_chunks)
    def _(c):
        off = pl.multiple_of(c * h_chunk, h_chunk)
        # First matmul: MXU with f32 accumulation.
        h = jnp.dot(x_ref[...], w1_ref[:, pl.ds(off, h_chunk)],
                    preferred_element_type=jnp.float32)
        # Bias + ReLU stay in f32 on the VPU (v5e has no bf16 VALU).
        h = jnp.maximum(h + b1_ref[:, pl.ds(off, h_chunk)], 0.0)
        # Second matmul: accumulate this hidden chunk's contribution.
        acc_ref[...] += jnp.dot(h.astype(w2_ref.dtype),
                                w2_ref[pl.ds(off, h_chunk), :],
                                preferred_element_type=jnp.float32)

    o_ref[...] = (acc_ref[...] + b2_ref[...]).astype(o_ref.dtype)


def prepare_params(w1_t, b1, w2_t, b2):
    """Pad/cast the parameters ONCE (outside the per-call path).

    Feature dims are zero-padded to multiples of 128 (lane-dense MXU tiles);
    weights are bf16, biases f32.  Zero padding is mathematically a no-op.
    Returns (w1p, b1p, w2p, b2p).
    """
    I, H = w1_t.shape
    O = w2_t.shape[1]
    Ip, Hp, Op = _round_up(I, 128), _round_up(H, 128), _round_up(O, 128)
    bf16, f32 = jnp.bfloat16, jnp.float32
    w1p = jnp.pad(w1_t.astype(bf16), ((0, Ip - I), (0, Hp - H)))
    b1p = jnp.pad(b1.reshape(1, -1).astype(f32), ((0, 0), (0, Hp - H)))
    w2p = jnp.pad(w2_t.astype(bf16), ((0, Hp - H), (0, Op - O)))
    b2p = jnp.pad(b2.reshape(1, -1).astype(f32), ((0, 0), (0, Op - O)))
    return w1p, b1p, w2p, b2p


def _resident_spec(block_shape, single_buffer):
    """Constant-index-map spec for weights/biases (DMA'd once, VMEM-resident)."""
    index_map = lambda i: (0, 0)
    if single_buffer:
        try:
            # Their block never changes -> a second buffer is pure VMEM waste.
            return pl.BlockSpec(block_shape, index_map, pipeline_mode=pl.Buffered(1))
        except TypeError:  # pipeline_mode kwarg unavailable in this jax version
            pass
    return pl.BlockSpec(block_shape, index_map)


def mlp_forward(x, w1p, b1p, w2p, b2p, *, out_features, max_batch_tile=512,
                h_chunk=512, out_dtype=jnp.float32, single_buffer_weights=True):
    """x: [B, I] f32 -> [B, out_features] out_dtype, using prepared (padded) params."""
    B, I = x.shape
    Ip, Hp = w1p.shape
    Hp2, Op = w2p.shape
    assert Hp == Hp2 and I <= Ip and out_features <= Op

    # Hidden chunk: largest multiple of 128 that divides Hp and is <= h_chunk.
    hc = min(_round_up(h_chunk, 128), Hp)
    while Hp % hc != 0:
        hc -= 128
    assert hc >= 128

    # Batch tile: multiple of 16 (bf16 packs 16 sublanes/vreg); keep >=2 grid
    # steps once the batch is big enough so "parallel" can use both v7x TCs.
    B16 = _round_up(B, 16)
    TB = min(max_batch_tile, B16)
    if B16 >= 32 and TB > 16:
        TB = min(TB, _round_up(B16 // 2, 16))
    Bp = _round_up(B, TB)
    grid = (Bp // TB,)

    xp = jnp.pad(x.astype(jnp.bfloat16), ((0, Bp - B), (0, Ip - I)))

    out_bytes = jnp.dtype(out_dtype).itemsize
    wbuf = 1 if single_buffer_weights else 2
    # VMEM budget: resident weights/biases + double-buffered x/out tiles
    # + per-chunk hidden intermediate (f32 + bf16 copy) + f32 accumulator.
    vmem_bytes = (
        wbuf * ((Ip * Hp + Hp * Op) * 2 + (Hp + Op) * 4)
        + 2 * TB * Ip * 2
        + 2 * TB * Op * out_bytes
        + TB * hc * 6
        + TB * Op * 4
    )
    # 1.5x headroom, floor at 32 MiB, ceiling at v7x's 64 MiB physical VMEM.
    vmem_limit = min(max(int(vmem_bytes * 1.5) + (2 << 20), 32 << 20), 64 << 20)

    cost = pl.CostEstimate(
        flops=2 * Bp * (Ip * Hp + Hp * Op),
        transcendentals=0,
        bytes_accessed=(Bp * Ip * 2 + (Ip * Hp + Hp * Op) * 2
                        + (Hp + Op) * 4 + Bp * Op * out_bytes),
    )

    out = pl.pallas_call(
        functools.partial(_mlp_kernel, h_chunk=hc),
        out_shape=jax.ShapeDtypeStruct((Bp, Op), out_dtype),
        grid_spec=pltpu.PrefetchScalarGridSpec(
            num_scalar_prefetch=0,
            grid=grid,
            in_specs=[
                pl.BlockSpec((TB, Ip), lambda i: (i, 0)),            # x: batch-tiled
                _resident_spec((Ip, Hp), single_buffer_weights),     # W1
                _resident_spec((1, Hp), single_buffer_weights),      # b1
                _resident_spec((Hp, Op), single_buffer_weights),     # W2
                _resident_spec((1, Op), single_buffer_weights),      # b2
            ],
            out_specs=pl.BlockSpec((TB, Op), lambda i: (i, 0)),
            scratch_shapes=[pltpu.VMEM((TB, Op), jnp.float32)],
        ),
        compiler_params=pltpu.CompilerParams(
            dimension_semantics=("parallel",),   # batch tiles shard across TCs (v7x)
            vmem_limit_bytes=vmem_limit,
        ),
        cost_estimate=cost,
    )(xp, w1p, b1p, w2p, b2p)

    return out[:B, :out_features]


def run_mlp(x, params, **kwargs):
    """Jit + run; falls back to default-buffered weight specs if this jax
    version rejects pipeline_mode=pl.Buffered(1) at lowering time."""
    fwd = jax.jit(functools.partial(mlp_forward, **kwargs))
    try:
        return jax.block_until_ready(fwd(x, *params))
    except Exception:
        if kwargs.get("single_buffer_weights", True) is False:
            raise
        fwd = jax.jit(functools.partial(mlp_forward, single_buffer_weights=False,
                                        **kwargs))
        return jax.block_until_ready(fwd(x, *params))


def init_params(key, input_size, hidden_size, output_size):
    """Deterministic init mimicking nn.Linear's U(-1/sqrt(fan_in), 1/sqrt(fan_in))."""
    k1, k2, k3, k4 = jax.random.split(key, 4)
    bound1 = 1.0 / jnp.sqrt(input_size)
    bound2 = 1.0 / jnp.sqrt(hidden_size)
    # Stored already transposed: [in_features, out_features].
    w1_t = jax.random.uniform(k1, (input_size, hidden_size), jnp.float32,
                              minval=-bound1, maxval=bound1)
    b1 = jax.random.uniform(k2, (1, hidden_size), jnp.float32,
                            minval=-bound1, maxval=bound1)
    w2_t = jax.random.uniform(k3, (hidden_size, output_size), jnp.float32,
                              minval=-bound2, maxval=bound2)
    b2 = jax.random.uniform(k4, (1, output_size), jnp.float32,
                            minval=-bound2, maxval=bound2)
    return w1_t, b1, w2_t, b2


if __name__ == "__main__":
    k0, k1, k2, k3 = jax.random.split(jax.random.PRNGKey(0), 4)

    # --- Test 1: tiny MLP matching the service's typical sizes -------------
    B1, I1, H1, O1 = 8, 16, 32, 8
    x1 = jax.random.normal(k0, (B1, I1), jnp.float32)
    w1_t, b1, w2_t, b2 = init_params(k1, I1, H1, O1)
    params1 = prepare_params(w1_t, b1, w2_t, b2)       # pad/cast ONCE, reused per call
    out1 = run_mlp(x1, params1, out_features=O1)
    ref1 = jnp.maximum(x1 @ w1_t + b1, 0.0) @ w2_t + b2
    assert out1.shape == (B1, O1)
    assert jnp.allclose(out1, ref1, atol=2e-2, rtol=2e-2), \
        f"max abs err {jnp.max(jnp.abs(out1 - ref1))}"

    # --- Test 2: exercises hidden-dim chunking + multi-step batch grid -----
    B2, I2, H2, O2 = 40, 64, 256, 24
    x2 = jax.random.normal(k2, (B2, I2), jnp.float32)
    w1_t2, b1_2, w2_t2, b2_2 = init_params(k3, I2, H2, O2)
    params2 = prepare_params(w1_t2, b1_2, w2_t2, b2_2)
    out2 = run_mlp(x2, params2, out_features=O2, h_chunk=128)
    ref2 = jnp.maximum(x2 @ w1_t2 + b1_2, 0.0) @ w2_t2 + b2_2
    assert out2.shape == (B2, O2)
    assert jnp.allclose(out2, ref2, atol=2e-2, rtol=2e-2), \
        f"max abs err {jnp.max(jnp.abs(out2 - ref2))}"

    print("KERNEL_OK")
</pallas_src>

<mosaic_0001>
module attributes {stable_mosaic.version = 11 : i64} {
  func.func @_mlp_kernel(%arg0: i32, %arg1: memref<16x128xbf16, #tpu.memory_space<vmem>>, %arg2: memref<128x128xbf16, #tpu.memory_space<vmem>>, %arg3: memref<1x128xf32, #tpu.memory_space<vmem>>, %arg4: memref<128x128xbf16, #tpu.memory_space<vmem>>, %arg5: memref<1x128xf32, #tpu.memory_space<vmem>>, %arg6: memref<16x128xf32, #tpu.memory_space<vmem>>, %arg7: memref<16x128xf32, #tpu.memory_space<vmem>>) attributes {dimension_semantics = [#tpu.dimension_semantics<parallel>], iteration_bounds = array<i64: 1>, scalar_prefetch = 0 : i64, scratch_operands = 1 : i64, tpu.core_type = #tpu.core_type<tc>, window_params = [{transform_indices = @transform_0, window_bounds = array<i64: 16, 128>}, {pipeline_mode = #tpu.pipeline_mode<synchronous>, transform_indices = @transform_1, window_bounds = array<i64: 128, 128>}, {pipeline_mode = #tpu.pipeline_mode<synchronous>, transform_indices = @transform_2, window_bounds = array<i64: 1, 128>}, {pipeline_mode = #tpu.pipeline_mode<synchronous>, transform_indices = @transform_3, window_bounds = array<i64: 128, 128>}, {pipeline_mode = #tpu.pipeline_mode<synchronous>, transform_indices = @transform_4, window_bounds = array<i64: 1, 128>}, {transform_indices = @transform_5, window_bounds = array<i64: 16, 128>}]} {
    %cst = arith.constant 0.000000e+00 : f32
    %0 = vector.broadcast %cst : f32 to vector<16x128xf32>
    %c0 = arith.constant 0 : index
    %c0_0 = arith.constant 0 : index
    %1 = vector.load %arg7[%c0, %c0_0] : memref<16x128xf32, #tpu.memory_space<vmem>>, vector<16x128xf32>
    tpu.vector_store %arg7[%c0, %c0_0], %0 {strides = array<i32>} : memref<16x128xf32, #tpu.memory_space<vmem>>, vector<16x128xf32>,
    %c0_i32 = arith.constant 0 : i32
    %c1_i32 = arith.constant 1 : i32
    %2 = arith.muli %c0_i32, %c1_i32 : i32
    %c0_i32_1 = arith.constant 0 : i32
    %3 = arith.addi %c0_i32_1, %2 : i32
    %c128_i32 = arith.constant 128 : i32
    %4 = arith.muli %3, %c128_i32 : i32
    %5 = tpu.assume_multiple %4, 128 : i32
    %c0_2 = arith.constant 0 : index
    %c0_3 = arith.constant 0 : index
    %6 = vector.load %arg1[%c0_2, %c0_3] : memref<16x128xbf16, #tpu.memory_space<vmem>>, vector<16x128xbf16>
    %c0_4 = arith.constant 0 : index
    %7 = arith.index_cast %5 : i32 to index
    %8 = vector.load %arg2[%c0_4, %7] : memref<128x128xbf16, #tpu.memory_space<vmem>>, vector<128x128xbf16>
    %cst_5 = arith.constant dense<0.000000e+00> : vector<16x128xf32>
    %9 = tpu.matmul %6, %8, %cst_5 {dimension_numbers = #tpu.dot_dimension_numbers<[1], [0], [0], [1], [0, 0, 1, 1], [], []>} : vector<16x128xbf16>, vector<128x128xbf16>, vector<16x128xf32> -> vector<16x128xf32>
    %c0_6 = arith.constant 0 : index
    %10 = arith.index_cast %5 : i32 to index
    %11 = vector.load %arg3[%c0_6, %10] : memref<1x128xf32, #tpu.memory_space<vmem>>, vector<1x128xf32>
    %12 = vector.broadcast %11 : vector<1x128xf32> to vector<16x128xf32>
    %13 = arith.addf %9, %12 : vector<16x128xf32>
    %cst_7 = arith.constant 0.000000e+00 : f32
    %14 = vector.broadcast %cst_7 : f32 to vector<16x128xf32>
    %15 = arith.maximumf %13, %14 : vector<16x128xf32>
    %c0_8 = arith.constant 0 : index
    %c0_9 = arith.constant 0 : index
    %16 = vector.load %arg7[%c0_8, %c0_9] : memref<16x128xf32, #tpu.memory_space<vmem>>, vector<16x128xf32>
    %17 = arith.truncf %15 : vector<16x128xf32> to vector<16x128xbf16>
    %18 = arith.index_cast %5 : i32 to index
    %c0_10 = arith.constant 0 : index
    %19 = vector.load %arg4[%18, %c0_10] : memref<128x128xbf16, #tpu.memory_space<vmem>>, vector<128x128xbf16>
    %cst_11 = arith.constant dense<0.000000e+00> : vector<16x128xf32>
    %20 = tpu.matmul %17, %19, %cst_11 {dimension_numbers = #tpu.dot_dimension_numbers<[1], [0], [0], [1], [0, 0, 1, 1], [], []>} : vector<16x128xbf16>, vector<128x128xbf16>, vector<16x128xf32> -> vector<16x128xf32>
    %21 = arith.addf %16, %20 : vector<16x128xf32>
    %c0_12 = arith.constant 0 : index
    %c0_13 = arith.constant 0 : index
    %22 = vector.load %arg7[%c0_12, %c0_13] : memref<16x128xf32, #tpu.memory_space<vmem>>, vector<16x128xf32>
    tpu.vector_store %arg7[%c0_12, %c0_13], %21 {strides = array<i32>} : memref<16x128xf32, #tpu.memory_space<vmem>>, vector<16x128xf32>,
    %c1_i32_14 = arith.constant 1 : i32
    %c0_15 = arith.constant 0 : index
    %c0_16 = arith.constant 0 : index
    %23 = vector.load %arg7[%c0_15, %c0_16] : memref<16x128xf32, #tpu.memory_space<vmem>>, vector<16x128xf32>
    %c0_17 = arith.constant 0 : index
    %c0_18 = arith.constant 0 : index
    %24 = vector.load %arg5[%c0_17, %c0_18] : memref<1x128xf32, #tpu.memory_space<vmem>>, vector<1x128xf32>
    %25 = vector.broadcast %24 : vector<1x128xf32> to vector<16x128xf32>
    %26 = arith.addf %23, %25 : vector<16x128xf32>
    %c0_19 = arith.constant 0 : index
    %c0_20 = arith.constant 0 : index
    %27 = vector.load %arg6[%c0_19, %c0_20] : memref<16x128xf32, #tpu.memory_space<vmem>>, vector<16x128xf32>
    tpu.vector_store %arg6[%c0_19, %c0_20], %26 {strides = array<i32>} : memref<16x128xf32, #tpu.memory_space<vmem>>, vector<16x128xf32>,
    return
  }
  func.func @transform_0(%arg0: i32) -> (i32, i32) {
    %c0_i32 = arith.constant 0 : i32
    %c0_i32_0 = arith.constant 0 : i32
    return %arg0, %c0_i32 : i32, i32
  }
  func.func @transform_1(%arg0: i32) -> (i32, i32) {
    %c0_i32 = arith.constant 0 : i32
    %c0_i32_0 = arith.constant 0 : i32
    %c0_i32_1 = arith.constant 0 : i32
    return %c0_i32, %c0_i32_0 : i32, i32
  }
  func.func @transform_2(%arg0: i32) -> (i32, i32) {
    %c0_i32 = arith.constant 0 : i32
    %c0_i32_0 = arith.constant 0 : i32
    %c0_i32_1 = arith.constant 0 : i32
    return %c0_i32, %c0_i32_0 : i32, i32
  }
  func.func @transform_3(%arg0: i32) -> (i32, i32) {
    %c0_i32 = arith.constant 0 : i32
    %c0_i32_0 = arith.constant 0 : i32
    %c0_i32_1 = arith.constant 0 : i32
    return %c0_i32, %c0_i32_0 : i32, i32
  }
  func.func @transform_4(%arg0: i32) -> (i32, i32) {
    %c0_i32 = arith.constant 0 : i32
    %c0_i32_0 = arith.constant 0 : i32
    %c0_i32_1 = arith.constant 0 : i32
    return %c0_i32, %c0_i32_0 : i32, i32
  }
  func.func @transform_5(%arg0: i32) -> (i32, i32) {
    %c0_i32 = arith.constant 0 : i32
    %c0_i32_0 = arith.constant 0 : i32
    return %arg0, %c0_i32 : i32, i32
  }
}

module attributes {stable_mosaic.version = 11 : i64} {
  func.func @_mlp_kernel(%arg0: i32, %arg1: memref<16x128xbf16, #tpu.memory_space<vmem>>, %arg2: memref<128x128xbf16, #tpu.memory_space<vmem>>, %arg3: memref<1x128xf32, #tpu.memory_space<vmem>>, %arg4: memref<128x128xbf16, #tpu.memory_space<vmem>>, %arg5: memref<1x128xf32, #tpu.memory_space<vmem>>, %arg6: memref<16x128xf32, #tpu.memory_space<vmem>>, %arg7: memref<16x128xf32, #tpu.memory_space<vmem>>) attributes {dimension_semantics = [#tpu.dimension_semantics<parallel>], iteration_bounds = array<i64: 1>, scalar_prefetch = 0 : i64, scratch_operands = 1 : i64, tpu.core_type = #tpu.core_type<tc>, window_params = [{transform_indices = @transform_0, window_bounds = array<i64: 16, 128>}, {pipeline_mode = #tpu.pipeline_mode<synchronous>, transform_indices = @transform_1, window_bounds = array<i64: 128, 128>}, {pipeline_mode = #tpu.pipeline_mode<synchronous>, transform_indices = @transform_2, window_bounds = array<i64: 1, 128>}, {pipeline_mode = #tpu.pipeline_mode<synchronous>, transform_indices = @transform_3, window_bounds = array<i64: 128, 128>}, {pipeline_mode = #tpu.pipeline_mode<synchronous>, transform_indices = @transform_4, window_bounds = array<i64: 1, 128>}, {transform_indices = @transform_5, window_bounds = array<i64: 16, 128>}]} {
    %cst = arith.constant 0.000000e+00 : f32
    %0 = vector.broadcast %cst : f32 to vector<16x128xf32>
    %c0 = arith.constant 0 : index
    %c0_0 = arith.constant 0 : index
    %1 = vector.load %arg7[%c0, %c0_0] : memref<16x128xf32, #tpu.memory_space<vmem>>, vector<16x128xf32>
    tpu.vector_store %arg7[%c0, %c0_0], %0 {strides = array<i32>} : memref<16x128xf32, #tpu.memory_space<vmem>>, vector<16x128xf32>,
    %c0_i32 = arith.constant 0 : i32
    %c1_i32 = arith.constant 1 : i32
    %2 = arith.muli %c0_i32, %c1_i32 : i32
    %c0_i32_1 = arith.constant 0 : i32
    %3 = arith.addi %c0_i32_1, %2 : i32
    %c128_i32 = arith.constant 128 : i32
    %4 = arith.muli %3, %c128_i32 : i32
    %5 = tpu.assume_multiple %4, 128 : i32
    %c0_2 = arith.constant 0 : index
    %c0_3 = arith.constant 0 : index
    %6 = vector.load %arg1[%c0_2, %c0_3] : memref<16x128xbf16, #tpu.memory_space<vmem>>, vector<16x128xbf16>
    %c0_4 = arith.constant 0 : index
    %7 = arith.index_cast %5 : i32 to index
    %8 = vector.load %arg2[%c0_4, %7] : memref<128x128xbf16, #tpu.memory_space<vmem>>, vector<128x128xbf16>
    %cst_5 = arith.constant dense<0.000000e+00> : vector<16x128xf32>
    %9 = tpu.matmul %6, %8, %cst_5 {dimension_numbers = #tpu.dot_dimension_numbers<[1], [0], [0], [1], [0, 0, 1, 1], [], []>} : vector<16x128xbf16>, vector<128x128xbf16>, vector<16x128xf32> -> vector<16x128xf32>
    %c0_6 = arith.constant 0 : index
    %10 = arith.index_cast %5 : i32 to index
    %11 = vector.load %arg3[%c0_6, %10] : memref<1x128xf32, #tpu.memory_space<vmem>>, vector<1x128xf32>
    %12 = vector.broadcast %11 : vector<1x128xf32> to vector<16x128xf32>
    %13 = arith.addf %9, %12 : vector<16x128xf32>
    %cst_7 = arith.constant 0.000000e+00 : f32
    %14 = vector.broadcast %cst_7 : f32 to vector<16x128xf32>
    %15 = arith.maximumf %13, %14 : vector<16x128xf32>
    %c0_8 = arith.constant 0 : index
    %c0_9 = arith.constant 0 : index
    %16 = vector.load %arg7[%c0_8, %c0_9] : memref<16x128xf32, #tpu.memory_space<vmem>>, vector<16x128xf32>
    %17 = arith.truncf %15 : vector<16x128xf32> to vector<16x128xbf16>
    %18 = arith.index_cast %5 : i32 to index
    %c0_10 = arith.constant 0 : index
    %19 = vector.load %arg4[%18, %c0_10] : memref<128x128xbf16, #tpu.memory_space<vmem>>, vector<128x128xbf16>
    %cst_11 = arith.constant dense<0.000000e+00> : vector<16x128xf32>
    %20 = tpu.matmul %17, %19, %cst_11 {dimension_numbers = #tpu.dot_dimension_numbers<[1], [0], [0], [1], [0, 0, 1, 1], [], []>} : vector<16x128xbf16>, vector<128x128xbf16>, vector<16x128xf32> -> vector<16x128xf32>
    %21 = arith.addf %16, %20 : vector<16x128xf32>
    %c0_12 = arith.constant 0 : index
    %c0_13 = arith.constant 0 : index
    %22 = vector.load %arg7[%c0_12, %c0_13] : memref<16x128xf32, #tpu.memory_space<vmem>>, vector<16x128xf32>
    tpu.vector_store %arg7[%c0_12, %c0_13], %21 {strides = array<i32>} : memref<16x128xf32, #tpu.memory_space<vmem>>, vector<16x128xf32>,
    %c1_i32_14 = arith.constant 1 : i32
    %c0_15 = arith.constant 0 : index
    %c0_16 = arith.constant 0 : index
    %23 = vector.load %arg7[%c0_15, %c0_16] : memref<16x128xf32, #tpu.memory_space<vmem>>, vector<16x128xf32>
    %c0_17 = arith.constant 0 : index
    %c0_18 = arith.constant 0 : index
    %24 = vector.load %arg5[%c0_17, %c0_18] : memref<1x128xf32, #tpu.memory_space<vmem>>, vector<1x128xf32>
    %25 = vector.broadcast %24 : vector<1x128xf32> to vector<16x128xf32>
    %26 = arith.addf %23, %25 : vector<16x128xf32>
    %c0_19 = arith.constant 0 : index
    %c0_20 = arith.constant 0 : index
    %27 = vector.load %arg6[%c0_19, %c0_20] : memref<16x128xf32, #tpu.memory_space<vmem>>, vector<16x128xf32>
    tpu.vector_store %arg6[%c0_19, %c0_20], %26 {strides = array<i32>} : memref<16x128xf32, #tpu.memory_space<vmem>>, vector<16x128xf32>,
    return
  }
  func.func @transform_0(%arg0: i32) -> (i32, i32) {
    %c0_i32 = arith.constant 0 : i32
    %c0_i32_0 = arith.constant 0 : i32
    return %arg0, %c0_i32 : i32, i32
  }
  func.func @transform_1(%arg0: i32) -> (i32, i32) {
    %c0_i32 = arith.constant 0 : i32
    %c0_i32_0 = arith.constant 0 : i32
    %c0_i32_1 = arith.constant 0 : i32
    return %c0_i32, %c0_i32_0 : i32, i32
  }
  func.func @transform_2(%arg0: i32) -> (i32, i32) {
    %c0_i32 = arith.constant 0 : i32
    %c0_i32_0 = arith.constant 0 : i32
    %c0_i32_1 = arith.constant 0 : i32
    return %c0_i32, %c0_i32_0 : i32, i32
  }
  func.func @transform_3(%arg0: i32) -> (i32, i32) {
    %c0_i32 = arith.constant 0 : i32
    %c0_i32_0 = arith.constant 0 : i32
    %c0_i32_1 = arith.constant 0 : i32
    return %c0_i32, %c0_i32_0 : i32, i32
  }
  func.func @transform_4(%arg0: i32) -> (i32, i32) {
    %c0_i32 = arith.constant 0 : i32
    %c0_i32_0 = arith.constant 0 : i32
    %c0_i32_1 = arith.constant 0 : i32
    return %c0_i32, %c0_i32_0 : i32, i32
  }
  func.func @transform_5(%arg0: i32) -> (i32, i32) {
    %c0_i32 = arith.constant 0 : i32
    %c0_i32_0 = arith.constant 0 : i32
    return %arg0, %c0_i32 : i32, i32
  }
}

</mosaic_0001>

<llo_original>
// kernel: mlp_forward.1
$region0: #{mlp_forward.1}
  #allocation0 [shape = 'u32[]', space=smem, size = 0x4, offset = 0x4, fixed_abs, tag = 'smem constant byte address 0x4 - core index']
  #allocation1 [shape = 'u32[144,128]{1,0:T(1,128)}', space=vmem, size = 0x12000, scoped, tag = 'internal scratch']
  #allocation2 [shape = 'f32[16,128]{1,0:T(8,128)}', space=vmem, size = 0x2000, scoped, tag = 'scratch operand']
  %s0 = inlined_call_operand.vmem [shape: bf16[16,128], index: 0, kind: input, shape index: {}]
  %s1 = inlined_call_operand.hbm [shape: bf16[128,128], index: 1, kind: input, shape index: {}]
  %s2 = inlined_call_operand.vmem [shape: f32[1,128], index: 2, kind: input, shape index: {}]
  %s3 = inlined_call_operand.hbm [shape: bf16[128,128], index: 3, kind: input, shape index: {}]
  %s4 = inlined_call_operand.vmem [shape: f32[1,128], index: 4, kind: input, shape index: {}]
  %s5 = inlined_call_operand.vmem [shape: f32[16,128], index: 5, kind: output, shape index: {}]
  %s6 = sld [smem:[#allocation0]]
  $region38: #{mlp_forward.1} parent=0
    _
  %s8 = ssub.s32 1, %s6
  %s9 = scalar_select 0, %s8, %s6
  $region1: #{mlp_forward.1} parent=0
    #allocation3 [shape = 'u8[32768]{0}', space=vmem, size = 0x8000, scoped, tag = 'input window, operand 1, single buffered']
    #allocation4 [shape = 's32[1]{0}', space=sflag, size = 0x4, scoped, tag = 'scoped memory for mlp_forward.1']
    #allocation5 [shape = 'u8[32768]{0}', space=vmem, size = 0x8000, scoped, tag = 'input window, operand 3, single buffered']
    #allocation6 [shape = 's32[1]{0}', space=sflag, size = 0x4, scoped, tag = 'scoped memory for mlp_forward.1']
    %10 = vsyncpa [#allocation4], 0
    %11 = vsyncpa [#allocation6], 0
    // Predicated region
    $region2: #{mlp_forward.1} parent=1 // pred_check
      _
    $region3: #{mlp_forward.1} parent=1 // pred_check_branch
      %13 = sbr.rel (0) target = $region5
    $region4: #{mlp_forward.1} parent=1 // pred_region
      _
    $region5: #{mlp_forward.1} parent=1 // pred_fallthru
      _
    // Predicated region
    $region6: #{mlp_forward.1} parent=1 // pred_check
      _
    $region7: #{mlp_forward.1} parent=1 // pred_check_branch
      %15 = sbr.rel (0) target = $region9
    $region8: #{mlp_forward.1} parent=1 // pred_region
      %s17 = ssub.s32 1024, 1024
      %18 = vsyncadd [#allocation4], %s17
      %s19 = sshll.u32 [#allocation3], 4
      %s20 = int_to_ptr.vmem [resolvable:$true] %s19
      %25 = dma.hbm_to_vmem [thread:$0]  %s1, 1024, %s20, [#allocation4], 64, 64, 4
    $region9: #{mlp_forward.1} parent=1 // pred_fallthru
      _
    // Predicated region
    $region10: #{mlp_forward.1} parent=1 // pred_check
      _
    $region11: #{mlp_forward.1} parent=1 // pred_check_branch
      %27 = sbr.rel (0) target = $region13
    $region12: #{mlp_forward.1} parent=1 // pred_region
      _
    $region13: #{mlp_forward.1} parent=1 // pred_fallthru
      _
    // Predicated region
    $region14: #{mlp_forward.1} parent=1 // pred_check
      _
    $region15: #{mlp_forward.1} parent=1 // pred_check_branch
      %29 = sbr.rel (0) target = $region17
    $region16: #{mlp_forward.1} parent=1 // pred_region
      %s31 = ssub.s32 1024, 1024
      %32 = vsyncadd [#allocation6], %s31
      %s33 = sshll.u32 [#allocation5], 4
      %s34 = int_to_ptr.vmem [resolvable:$true] %s33
      %39 = dma.hbm_to_vmem [thread:$0]  %s3, 1024, %s34, [#allocation6], 64, 64, 4
    $region17: #{mlp_forward.1} parent=1 // pred_fallthru
      _
    // Predicated region
    $region18: #{mlp_forward.1} parent=1 // pred_check
      _
    $region19: #{mlp_forward.1} parent=1 // pred_check_branch
      %41 = sbr.rel (0) target = $region21
    $region20: #{mlp_forward.1} parent=1 // pred_region
      _
    $region21: #{mlp_forward.1} parent=1 // pred_fallthru
      _
    // Predicated region
    $region22: #{mlp_forward.1} parent=1 // pred_check
      _
    $region23: #{mlp_forward.1} parent=1 // pred_check_branch
      %43 = sbr.rel (0) target = $region25
    $region24: #{mlp_forward.1} parent=1 // pred_region
      %44 = dma.done [#allocation4], 1024
    $region25: #{mlp_forward.1} parent=1 // pred_fallthru
      _
    // Predicated region
    $region26: #{mlp_forward.1} parent=1 // pred_check
      _
    $region27: #{mlp_forward.1} parent=1 // pred_check_branch
      %46 = sbr.rel (0) target = $region29
    $region28: #{mlp_forward.1} parent=1 // pred_region
      %47 = dma.done [#allocation6], 1024
    $region29: #{mlp_forward.1} parent=1 // pred_fallthru
      _
    %49 = vst [vmem:[#allocation2] sm:$0xff] 0.0
    %50 = vst [vmem:[#allocation2 + $0x8] sm:$0xff] 0.0
    %v51 = vld [vmem:[%s0] sm:$0xf]
    %v52 = vld [vmem:[%s0 + $0x4] sm:$0xf]
    %v53 = vld [vmem:[#allocation3] sm:$0xf]
    %v54 = vld [vmem:[#allocation3 + $0x4] sm:$0xf]
    %v55 = vld [vmem:[#allocation3 + $0x8] sm:$0xf]
    %v56 = vld [vmem:[#allocation3 + $0xc] sm:$0xf]
    %v57 = vld [vmem:[#allocation3 + $0x10] sm:$0xf]
    %v58 = vld [vmem:[#allocation3 + $0x14] sm:$0xf]
    %v59 = vld [vmem:[#allocation3 + $0x18] sm:$0xf]
    %v60 = vld [vmem:[#allocation3 + $0x1c] sm:$0xf]
    %v61 = vld [vmem:[#allocation3 + $0x20] sm:$0xf]
    %v62 = vld [vmem:[#allocation3 + $0x24] sm:$0xf]
    %v63 = vld [vmem:[#allocation3 + $0x28] sm:$0xf]
    %v64 = vld [vmem:[#allocation3 + $0x2c] sm:$0xf]
    %v65 = vld [vmem:[#allocation3 + $0x30] sm:$0xf]
    %v66 = vld [vmem:[#allocation3 + $0x34] sm:$0xf]
    %v67 = vld [vmem:[#allocation3 + $0x38] sm:$0xf]
    %v68 = vld [vmem:[#allocation3 + $0x3c] sm:$0xf]
    %v69 = vld [vmem:[%s2] sm:$0x1]
    %v71 = vlaneseq
    %v72 = vshrl.u32 %v71, 7
    %v73 = vsub.s32 0, %v72
    %v74 = vrot.slane %v69, %v73
    %v78 = vunpack.c.l.b16 %v51
    %v79 = vunpack.c.l.b16 %v52
    %v80 = vpack.c.b16 %v79, %v78
    %v98 = vunpack.c.l.b16 %v53
    %v99 = vunpack.c.l.b16 %v54
    %v100 = vunpack.c.l.b16 %v55
    %v101 = vunpack.c.l.b16 %v56
    %v102 = vunpack.c.l.b16 %v57
    %v103 = vunpack.c.l.b16 %v58
    %v104 = vunpack.c.l.b16 %v59
    %v105 = vunpack.c.l.b16 %v60
    %v106 = vunpack.c.l.b16 %v61
    %v107 = vunpack.c.l.b16 %v62
    %v108 = vunpack.c.l.b16 %v63
    %v109 = vunpack.c.l.b16 %v64
    %v110 = vunpack.c.l.b16 %v65
    %v111 = vunpack.c.l.b16 %v66
    %v112 = vunpack.c.l.b16 %v67
    %v113 = vunpack.c.l.b16 %v68
    %v114 = vpack.c.b16 %v99, %v98
    %v115 = vpack.c.b16 %v101, %v100
    %v116 = vpack.c.b16 %v103, %v102
    %v117 = vpack.c.b16 %v105, %v104
    %v118 = vpack.c.b16 %v107, %v106
    %v119 = vpack.c.b16 %v109, %v108
    %v120 = vpack.c.b16 %v111, %v110
    %v121 = vpack.c.b16 %v113, %v112
    %130 = vmatprep.subr.bf16.mxu0 0
    %131 = vmatpush1.bf16.msra.mxu0 %v121
    %132 = vmatprep.subr.bf16.mxu0 0
    %133 = vmatpush1.bf16.msra.mxu0 %v120
    %134 = vmatprep.subr.bf16.mxu0 0
    %135 = vmatpush1.bf16.msra.mxu0 %v119
    %136 = vmatprep.subr.bf16.mxu0 0
    %137 = vmatpush1.bf16.msra.mxu0 %v118
    %138 = vmatprep.subr.bf16.mxu0 0
    %139 = vmatpush1.bf16.msra.mxu0 %v117
    %140 = vmatprep.subr.bf16.mxu0 0
    %141 = vmatpush1.bf16.msra.mxu0 %v116
    %142 = vmatprep.subr.bf16.mxu0 0
    %143 = vmatpush1.bf16.msra.mxu0 %v115
    %144 = vmatprep.subr.bf16.mxu0 0
    %145 = vmatpush1.bf16.msra.mxu0 %v114
    %146 = vmatprep.subr.bf16.mxu0 0
    %147 = vmatpush2.bf16.msra.mxu0 0
    %148 = vmatprep.subr.bf16.mxu0 0
    %149 = vmatpush2.bf16.msra.mxu0 0
    %150 = vmatprep.subr.bf16.mxu0 0
    %151 = vmatpush2.bf16.msra.mxu0 0
    %152 = vmatprep.subr.bf16.mxu0 0
    %153 = vmatpush2.bf16.msra.mxu0 0
    %154 = vmatprep.subr.bf16.mxu0 0
    %155 = vmatpush2.bf16.msra.mxu0 0
    %156 = vmatprep.subr.bf16.mxu0 0
    %157 = vmatpush2.bf16.msra.mxu0 0
    %158 = vmatprep.subr.bf16.mxu0 0
    %159 = vmatpush2.bf16.msra.mxu0 0
    %160 = vmatprep.subr.bf16.mxu0 0
    %161 = vmatpush2.bf16.msra.mxu0 0
    %162 = vmatprep.mubr.bf16.mxu0 0
    %163 = vmatmul.mubr.bf16.gmra.mxu0 %v80
    %v164 = vpop.f32.mrf.mxu0
    %v165 = vadd.f32 %v74, %v164
    %v166 = vpop.f32.mrf.mxu0
    %v167 = vpop.f32.mrf.mxu0
    %v168 = vadd.f32 %v74, %v167
    %v169 = vpop.f32.mrf.mxu0
    %170 = vdwg.mxu0
    %v171 = vmax.f32 %v165, 0.0
    %v172 = vmax.f32 %v168, 0.0
    %v173 = vld [vmem:[#allocation2] sm:$0xff]
    %v174 = vld [vmem:[#allocation2 + $0x8] sm:$0xff]
    %v175 = vpack.c.bf16 %v172, %v171
    %v176 = vld [vmem:[#allocation5] sm:$0xf]
    %v177 = vld [vmem:[#allocation5 + $0x4] sm:$0xf]
    %v178 = vld [vmem:[#allocation5 + $0x8] sm:$0xf]
    %v179 = vld [vmem:[#allocation5 + $0xc] sm:$0xf]
    %v180 = vld [vmem:[#allocation5 + $0x10] sm:$0xf]
    %v181 = vld [vmem:[#allocation5 + $0x14] sm:$0xf]
    %v182 = vld [vmem:[#allocation5 + $0x18] sm:$0xf]
    %v183 = vld [vmem:[#allocation5 + $0x1c] sm:$0xf]
    %v184 = vld [vmem:[#allocation5 + $0x20] sm:$0xf]
    %v185 = vld [vmem:[#allocation5 + $0x24] sm:$0xf]
    %v186 = vld [vmem:[#allocation5 + $0x28] sm:$0xf]
    %v187 = vld [vmem:[#allocation5 + $0x2c] sm:$0xf]
    %v188 = vld [vmem:[#allocation5 + $0x30] sm:$0xf]
    %v189 = vld [vmem:[#allocation5 + $0x34] sm:$0xf]
    %v190 = vld [vmem:[#allocation5 + $0x38] sm:$0xf]
    %v191 = vld [vmem:[#allocation5 + $0x3c] sm:$0xf]
    %v208 = vunpack.c.l.b16 %v176
    %v209 = vunpack.c.l.b16 %v177
    %v210 = vunpack.c.l.b16 %v178
    %v211 = vunpack.c.l.b16 %v179
    %v212 = vunpack.c.l.b16 %v180
    %v213 = vunpack.c.l.b16 %v181
    %v214 = vunpack.c.l.b16 %v182
    %v215 = vunpack.c.l.b16 %v183
    %v216 = vunpack.c.l.b16 %v184
    %v217 = vunpack.c.l.b16 %v185
    %v218 = vunpack.c.l.b16 %v186
    %v219 = vunpack.c.l.b16 %v187
    %v220 = vunpack.c.l.b16 %v188
    %v221 = vunpack.c.l.b16 %v189
    %v222 = vunpack.c.l.b16 %v190
    %v223 = vunpack.c.l.b16 %v191
    %v224 = vpack.c.b16 %v209, %v208
    %v225 = vpack.c.b16 %v211, %v210
    %v226 = vpack.c.b16 %v213, %v212
    %v227 = vpack.c.b16 %v215, %v214
    %v228 = vpack.c.b16 %v217, %v216
    %v229 = vpack.c.b16 %v219, %v218
    %v230 = vpack.c.b16 %v221, %v220
    %v231 = vpack.c.b16 %v223, %v222
    %240 = vmatprep.subr.bf16.mxu0 0
    %241 = vmatpush1.bf16.msra.mxu0 %v231
    %242 = vmatprep.subr.bf16.mxu0 0
    %243 = vmatpush1.bf16.msra.mxu0 %v230
    %244 = vmatprep.subr.bf16.mxu0 0
    %245 = vmatpush1.bf16.msra.mxu0 %v229
    %246 = vmatprep.subr.bf16.mxu0 0
    %247 = vmatpush1.bf16.msra.mxu0 %v228
    %248 = vmatprep.subr.bf16.mxu0 0
    %249 = vmatpush1.bf16.msra.mxu0 %v227
    %250 = vmatprep.subr.bf16.mxu0 0
    %251 = vmatpush1.bf16.msra.mxu0 %v226
    %252 = vmatprep.subr.bf16.mxu0 0
    %253 = vmatpush1.bf16.msra.mxu0 %v225
    %254 = vmatprep.subr.bf16.mxu0 0
    %255 = vmatpush1.bf16.msra.mxu0 %v224
    %256 = vmatprep.subr.bf16.mxu0 0
    %257 = vmatpush2.bf16.msra.mxu0 0
    %258 = vmatprep.subr.bf16.mxu0 0
    %259 = vmatpush2.bf16.msra.mxu0 0
    %260 = vmatprep.subr.bf16.mxu0 0
    %261 = vmatpush2.bf16.msra.mxu0 0
    %262 = vmatprep.subr.bf16.mxu0 0
    %263 = vmatpush2.bf16.msra.mxu0 0
    %264 = vmatprep.subr.bf16.mxu0 0
    %265 = vmatpush2.bf16.msra.mxu0 0
    %266 = vmatprep.subr.bf16.mxu0 0
    %267 = vmatpush2.bf16.msra.mxu0 0
    %268 = vmatprep.subr.bf16.mxu0 0
    %269 = vmatpush2.bf16.msra.mxu0 0
    %270 = vmatprep.subr.bf16.mxu0 0
    %271 = vmatpush2.bf16.msra.mxu0 0
    %272 = vmatprep.mubr.bf16.mxu0 0
    %273 = vmatmul.mubr.bf16.gmra.mxu0 %v175
    %v274 = vpop.f32.mrf.mxu0
    %v275 = vadd.f32 0.0, %v274
    %v276 = vpop.f32.mrf.mxu0
    %v277 = vpop.f32.mrf.mxu0
    %v278 = vadd.f32 0.0, %v277
    %v279 = vpop.f32.mrf.mxu0
    %280 = vdwg.mxu0
    %v281 = vadd.f32 %v173, %v275
    %v282 = vadd.f32 %v174, %v278
    %283 = vst [vmem:[#allocation2] sm:$0xff] %v281
    %284 = vst [vmem:[#allocation2 + $0x8] sm:$0xff] %v282
    %v285 = vld [vmem:[#allocation2] sm:$0xff]
    %v286 = vld [vmem:[#allocation2 + $0x8] sm:$0xff]
    %v287 = vld [vmem:[%s4] sm:$0x1]
    %v289 = vlaneseq
    %v290 = vshrl.u32 %v289, 7
    %v291 = vsub.s32 0, %v290
    %v292 = vrot.slane %v287, %v291
    %v294 = vadd.f32 %v285, %v292
    %v295 = vadd.f32 %v286, %v292
    %296 = vst [vmem:[%s5] sm:$0xff] %v294
    %297 = vst [vmem:[%s5 + $0x8] sm:$0xff] %v295
    // Predicated region
    $region30: #{mlp_forward.1} parent=1 // pred_check
      _
    $region31: #{mlp_forward.1} parent=1 // pred_check_branch
      %299 = sbr.rel (0) target = $region33
    $region32: #{mlp_forward.1} parent=1 // pred_region
      _
    $region33: #{mlp_forward.1} parent=1 // pred_fallthru
      _
    // Predicated region
    $region34: #{mlp_forward.1} parent=1 // pred_check
      _
    $region35: #{mlp_forward.1} parent=1 // pred_check_branch
      %301 = sbr.rel (0) target = $region37
    $region36: #{mlp_forward.1} parent=1 // pred_region
      _
    $region37: #{mlp_forward.1} parent=1 // pred_fallthru
      _
    %302 = vsyncpa [#allocation4], 1
    %303 = vsyncpa [#allocation6], 1

// kernel: mlp_forward.1
$region0: #{mlp_forward.1}
  #allocation0 [shape = 'u32[]', space=smem, size = 0x4, offset = 0x4, fixed_abs, tag = 'smem constant byte address 0x4 - core index']
  #allocation1 [shape = 'u32[144,128]{1,0:T(1,128)}', space=vmem, size = 0x12000, scoped, tag = 'internal scratch']
  #allocation2 [shape = 'f32[16,128]{1,0:T(8,128)}', space=vmem, size = 0x2000, scoped, tag = 'scratch operand']
  %s0 = inlined_call_operand.vmem [shape: bf16[16,128], index: 0, kind: input, shape index: {}]
  %s1 = inlined_call_operand.hbm [shape: bf16[128,128], index: 1, kind: input, shape index: {}]
  %s2 = inlined_call_operand.vmem [shape: f32[1,128], index: 2, kind: input, shape index: {}]
  %s3 = inlined_call_operand.hbm [shape: bf16[128,128], index: 3, kind: input, shape index: {}]
  %s4 = inlined_call_operand.vmem [shape: f32[1,128], index: 4, kind: input, shape index: {}]
  %s5 = inlined_call_operand.vmem [shape: f32[16,128], index: 5, kind: output, shape index: {}]
  %s6 = sld [smem:[#allocation0]]
  $region38: #{mlp_forward.1} parent=0
    _
  %s8 = ssub.s32 1, %s6
  %s9 = scalar_select 0, %s8, %s6
  $region1: #{mlp_forward.1} parent=0
    #allocation3 [shape = 'u8[32768]{0}', space=vmem, size = 0x8000, scoped, tag = 'input window, operand 1, single buffered']
    #allocation4 [shape = 's32[1]{0}', space=sflag, size = 0x4, scoped, tag = 'scoped memory for mlp_forward.1']
    #allocation5 [shape = 'u8[32768]{0}', space=vmem, size = 0x8000, scoped, tag = 'input window, operand 3, single buffered']
    #allocation6 [shape = 's32[1]{0}', space=sflag, size = 0x4, scoped, tag = 'scoped memory for mlp_forward.1']
    %10 = vsyncpa [#allocation4], 0
    %11 = vsyncpa [#allocation6], 0
    // Predicated region
    $region2: #{mlp_forward.1} parent=1 // pred_check
      _
    $region3: #{mlp_forward.1} parent=1 // pred_check_branch
      %13 = sbr.rel (0) target = $region5
    $region4: #{mlp_forward.1} parent=1 // pred_region
      _
    $region5: #{mlp_forward.1} parent=1 // pred_fallthru
      _
    // Predicated region
    $region6: #{mlp_forward.1} parent=1 // pred_check
      _
    $region7: #{mlp_forward.1} parent=1 // pred_check_branch
      %15 = sbr.rel (0) target = $region9
    $region8: #{mlp_forward.1} parent=1 // pred_region
      %s17 = ssub.s32 1024, 1024
      %18 = vsyncadd [#allocation4], %s17
      %s19 = sshll.u32 [#allocation3], 4
      %s20 = int_to_ptr.vmem [resolvable:$true] %s19
      %25 = dma.hbm_to_vmem [thread:$0]  %s1, 1024, %s20, [#allocation4], 64, 64, 4
    $region9: #{mlp_forward.1} parent=1 // pred_fallthru
      _
    // Predicated region
    $region10: #{mlp_forward.1} parent=1 // pred_check
      _
    $region11: #{mlp_forward.1} parent=1 // pred_check_branch
      %27 = sbr.rel (0) target = $region13
    $region12: #{mlp_forward.1} parent=1 // pred_region
      _
    $region13: #{mlp_forward.1} parent=1 // pred_fallthru
      _
    // Predicated region
    $region14: #{mlp_forward.1} parent=1 // pred_check
      _
    $region15: #{mlp_forward.1} parent=1 // pred_check_branch
      %29 = sbr.rel (0) target = $region17
    $region16: #{mlp_forward.1} parent=1 // pred_region
      %s31 = ssub.s32 1024, 1024
      %32 = vsyncadd [#allocation6], %s31
      %s33 = sshll.u32 [#allocation5], 4
      %s34 = int_to_ptr.vmem [resolvable:$true] %s33
      %39 = dma.hbm_to_vmem [thread:$0]  %s3, 1024, %s34, [#allocation6], 64, 64, 4
    $region17: #{mlp_forward.1} parent=1 // pred_fallthru
      _
    // Predicated region
    $region18: #{mlp_forward.1} parent=1 // pred_check
      _
    $region19: #{mlp_forward.1} parent=1 // pred_check_branch
      %41 = sbr.rel (0) target = $region21
    $region20: #{mlp_forward.1} parent=1 // pred_region
      _
    $region21: #{mlp_forward.1} parent=1 // pred_fallthru
      _
    // Predicated region
    $region22: #{mlp_forward.1} parent=1 // pred_check
      _
    $region23: #{mlp_forward.1} parent=1 // pred_check_branch
      %43 = sbr.rel (0) target = $region25
    $region24: #{mlp_forward.1} parent=1 // pred_region
      %44 = dma.done [#allocation4], 1024
    $region25: #{mlp_forward.1} parent=1 // pred_fallthru
      _
    // Predicated region
    $region26: #{mlp_forward.1} parent=1 // pred_check
      _
    $region27: #{mlp_forward.1} parent=1 // pred_check_branch
      %46 = sbr.rel (0) target = $region29
    $region28: #{mlp_forward.1} parent=1 // pred_region
      %47 = dma.done [#allocation6], 1024
    $region29: #{mlp_forward.1} parent=1 // pred_fallthru
      _
    %49 = vst [vmem:[#allocation2] sm:$0xff] 0.0
    %50 = vst [vmem:[#allocation2 + $0x8] sm:$0xff] 0.0
    %v51 = vld [vmem:[%s0] sm:$0xf]
    %v52 = vld [vmem:[%s0 + $0x4] sm:$0xf]
    %v53 = vld [vmem:[#allocation3] sm:$0xf]
    %v54 = vld [vmem:[#allocation3 + $0x4] sm:$0xf]
    %v55 = vld [vmem:[#allocation3 + $0x8] sm:$0xf]
    %v56 = vld [vmem:[#allocation3 + $0xc] sm:$0xf]
    %v57 = vld [vmem:[#allocation3 + $0x10] sm:$0xf]
    %v58 = vld [vmem:[#allocation3 + $0x14] sm:$0xf]
    %v59 = vld [vmem:[#allocation3 + $0x18] sm:$0xf]
    %v60 = vld [vmem:[#allocation3 + $0x1c] sm:$0xf]
    %v61 = vld [vmem:[#allocation3 + $0x20] sm:$0xf]
    %v62 = vld [vmem:[#allocation3 + $0x24] sm:$0xf]
    %v63 = vld [vmem:[#allocation3 + $0x28] sm:$0xf]
    %v64 = vld [vmem:[#allocation3 + $0x2c] sm:$0xf]
    %v65 = vld [vmem:[#allocation3 + $0x30] sm:$0xf]
    %v66 = vld [vmem:[#allocation3 + $0x34] sm:$0xf]
    %v67 = vld [vmem:[#allocation3 + $0x38] sm:$0xf]
    %v68 = vld [vmem:[#allocation3 + $0x3c] sm:$0xf]
    %v69 = vld [vmem:[%s2] sm:$0x1]
    %v71 = vlaneseq
    %v72 = vshrl.u32 %v71, 7
    %v73 = vsub.s32 0, %v72
    %v74 = vrot.slane %v69, %v73
    %v78 = vunpack.c.l.b16 %v51
    %v79 = vunpack.c.l.b16 %v52
    %v80 = vpack.c.b16 %v79, %v78
    %v98 = vunpack.c.l.b16 %v53
    %v99 = vunpack.c.l.b16 %v54
    %v100 = vunpack.c.l.b16 %v55
    %v101 = vunpack.c.l.b16 %v56
    %v102 = vunpack.c.l.b16 %v57
    %v103 = vunpack.c.l.b16 %v58
    %v104 = vunpack.c.l.b16 %v59
    %v105 = vunpack.c.l.b16 %v60
    %v106 = vunpack.c.l.b16 %v61
    %v107 = vunpack.c.l.b16 %v62
    %v108 = vunpack.c.l.b16 %v63
    %v109 = vunpack.c.l.b16 %v64
    %v110 = vunpack.c.l.b16 %v65
    %v111 = vunpack.c.l.b16 %v66
    %v112 = vunpack.c.l.b16 %v67
    %v113 = vunpack.c.l.b16 %v68
    %v114 = vpack.c.b16 %v99, %v98
    %v115 = vpack.c.b16 %v101, %v100
    %v116 = vpack.c.b16 %v103, %v102
    %v117 = vpack.c.b16 %v105, %v104
    %v118 = vpack.c.b16 %v107, %v106
    %v119 = vpack.c.b16 %v109, %v108
    %v120 = vpack.c.b16 %v111, %v110
    %v121 = vpack.c.b16 %v113, %v112
    %130 = vmatprep.subr.bf16.mxu0 0
    %131 = vmatpush1.bf16.msra.mxu0 %v121
    %132 = vmatprep.subr.bf16.mxu0 0
    %133 = vmatpush1.bf16.msra.mxu0 %v120
    %134 = vmatprep.subr.bf16.mxu0 0
    %135 = vmatpush1.bf16.msra.mxu0 %v119
    %136 = vmatprep.subr.bf16.mxu0 0
    %137 = vmatpush1.bf16.msra.mxu0 %v118
    %138 = vmatprep.subr.bf16.mxu0 0
    %139 = vmatpush1.bf16.msra.mxu0 %v117
    %140 = vmatprep.subr.bf16.mxu0 0
    %141 = vmatpush1.bf16.msra.mxu0 %v116
    %142 = vmatprep.subr.bf16.mxu0 0
    %143 = vmatpush1.bf16.msra.mxu0 %v115
    %144 = vmatprep.subr.bf16.mxu0 0
    %145 = vmatpush1.bf16.msra.mxu0 %v114
    %146 = vmatprep.subr.bf16.mxu0 0
    %147 = vmatpush2.bf16.msra.mxu0 0
    %148 = vmatprep.subr.bf16.mxu0 0
    %149 = vmatpush2.bf16.msra.mxu0 0
    %150 = vmatprep.subr.bf16.mxu0 0
    %151 = vmatpush2.bf16.msra.mxu0 0
    %152 = vmatprep.subr.bf16.mxu0 0
    %153 = vmatpush2.bf16.msra.mxu0 0
    %154 = vmatprep.subr.bf16.mxu0 0
    %155 = vmatpush2.bf16.msra.mxu0 0
    %156 = vmatprep.subr.bf16.mxu0 0
    %157 = vmatpush2.bf16.msra.mxu0 0
    %158 = vmatprep.subr.bf16.mxu0 0
    %159 = vmatpush2.bf16.msra.mxu0 0
    %160 = vmatprep.subr.bf16.mxu0 0
    %161 = vmatpush2.bf16.msra.mxu0 0
    %162 = vmatprep.mubr.bf16.mxu0 0
    %163 = vmatmul.mubr.bf16.gmra.mxu0 %v80
    %v164 = vpop.f32.mrf.mxu0
    %v165 = vadd.f32 %v74, %v164
    %v166 = vpop.f32.mrf.mxu0
    %v167 = vpop.f32.mrf.mxu0
    %v168 = vadd.f32 %v74, %v167
    %v169 = vpop.f32.mrf.mxu0
    %170 = vdwg.mxu0
    %v171 = vmax.f32 %v165, 0.0
    %v172 = vmax.f32 %v168, 0.0
    %v173 = vld [vmem:[#allocation2] sm:$0xff]
    %v174 = vld [vmem:[#allocation2 + $0x8] sm:$0xff]
    %v175 = vpack.c.bf16 %v172, %v171
    %v176 = vld [vmem:[#allocation5] sm:$0xf]
    %v177 = vld [vmem:[#allocation5 + $0x4] sm:$0xf]
    %v178 = vld [vmem:[#allocation5 + $0x8] sm:$0xf]
    %v179 = vld [vmem:[#allocation5 + $0xc] sm:$0xf]
    %v180 = vld [vmem:[#allocation5 + $0x10] sm:$0xf]
    %v181 = vld [vmem:[#allocation5 + $0x14] sm:$0xf]
    %v182 = vld [vmem:[#allocation5 + $0x18] sm:$0xf]
    %v183 = vld [vmem:[#allocation5 + $0x1c] sm:$0xf]
    %v184 = vld [vmem:[#allocation5 + $0x20] sm:$0xf]
    %v185 = vld [vmem:[#allocation5 + $0x24] sm:$0xf]
    %v186 = vld [vmem:[#allocation5 + $0x28] sm:$0xf]
    %v187 = vld [vmem:[#allocation5 + $0x2c] sm:$0xf]
    %v188 = vld [vmem:[#allocation5 + $0x30] sm:$0xf]
    %v189 = vld [vmem:[#allocation5 + $0x34] sm:$0xf]
    %v190 = vld [vmem:[#allocation5 + $0x38] sm:$0xf]
    %v191 = vld [vmem:[#allocation5 + $0x3c] sm:$0xf]
    %v208 = vunpack.c.l.b16 %v176
    %v209 = vunpack.c.l.b16 %v177
    %v210 = vunpack.c.l.b16 %v178
    %v211 = vunpack.c.l.b16 %v179
    %v212 = vunpack.c.l.b16 %v180
    %v213 = vunpack.c.l.b16 %v181
    %v214 = vunpack.c.l.b16 %v182
    %v215 = vunpack.c.l.b16 %v183
    %v216 = vunpack.c.l.b16 %v184
    %v217 = vunpack.c.l.b16 %v185
    %v218 = vunpack.c.l.b16 %v186
    %v219 = vunpack.c.l.b16 %v187
    %v220 = vunpack.c.l.b16 %v188
    %v221 = vunpack.c.l.b16 %v189
    %v222 = vunpack.c.l.b16 %v190
    %v223 = vunpack.c.l.b16 %v191
    %v224 = vpack.c.b16 %v209, %v208
    %v225 = vpack.c.b16 %v211, %v210
    %v226 = vpack.c.b16 %v213, %v212
    %v227 = vpack.c.b16 %v215, %v214
    %v228 = vpack.c.b16 %v217, %v216
    %v229 = vpack.c.b16 %v219, %v218
    %v230 = vpack.c.b16 %v221, %v220
    %v231 = vpack.c.b16 %v223, %v222
    %240 = vmatprep.subr.bf16.mxu0 0
    %241 = vmatpush1.bf16.msra.mxu0 %v231
    %242 = vmatprep.subr.bf16.mxu0 0
    %243 = vmatpush1.bf16.msra.mxu0 %v230
    %244 = vmatprep.subr.bf16.mxu0 0
    %245 = vmatpush1.bf16.msra.mxu0 %v229
    %246 = vmatprep.subr.bf16.mxu0 0
    %247 = vmatpush1.bf16.msra.mxu0 %v228
    %248 = vmatprep.subr.bf16.mxu0 0
    %249 = vmatpush1.bf16.msra.mxu0 %v227
    %250 = vmatprep.subr.bf16.mxu0 0
    %251 = vmatpush1.bf16.msra.mxu0 %v226
    %252 = vmatprep.subr.bf16.mxu0 0
    %253 = vmatpush1.bf16.msra.mxu0 %v225
    %254 = vmatprep.subr.bf16.mxu0 0
    %255 = vmatpush1.bf16.msra.mxu0 %v224
    %256 = vmatprep.subr.bf16.mxu0 0
    %257 = vmatpush2.bf16.msra.mxu0 0
    %258 = vmatprep.subr.bf16.mxu0 0
    %259 = vmatpush2.bf16.msra.mxu0 0
    %260 = vmatprep.subr.bf16.mxu0 0
    %261 = vmatpush2.bf16.msra.mxu0 0
    %262 = vmatprep.subr.bf16.mxu0 0
    %263 = vmatpush2.bf16.msra.mxu0 0
    %264 = vmatprep.subr.bf16.mxu0 0
    %265 = vmatpush2.bf16.msra.mxu0 0
    %266 = vmatprep.subr.bf16.mxu0 0
    %267 = vmatpush2.bf16.msra.mxu0 0
    %268 = vmatprep.subr.bf16.mxu0 0
    %269 = vmatpush2.bf16.msra.mxu0 0
    %270 = vmatprep.subr.bf16.mxu0 0
    %271 = vmatpush2.bf16.msra.mxu0 0
    %272 = vmatprep.mubr.bf16.mxu0 0
    %273 = vmatmul.mubr.bf16.gmra.mxu0 %v175
    %v274 = vpop.f32.mrf.mxu0
    %v275 = vadd.f32 0.0, %v274
    %v276 = vpop.f32.mrf.mxu0
    %v277 = vpop.f32.mrf.mxu0
    %v278 = vadd.f32 0.0, %v277
    %v279 = vpop.f32.mrf.mxu0
    %280 = vdwg.mxu0
    %v281 = vadd.f32 %v173, %v275
    %v282 = vadd.f32 %v174, %v278
    %283 = vst [vmem:[#allocation2] sm:$0xff] %v281
    %284 = vst [vmem:[#allocation2 + $0x8] sm:$0xff] %v282
    %v285 = vld [vmem:[#allocation2] sm:$0xff]
    %v286 = vld [vmem:[#allocation2 + $0x8] sm:$0xff]
    %v287 = vld [vmem:[%s4] sm:$0x1]
    %v289 = vlaneseq
    %v290 = vshrl.u32 %v289, 7
    %v291 = vsub.s32 0, %v290
    %v292 = vrot.slane %v287, %v291
    %v294 = vadd.f32 %v285, %v292
    %v295 = vadd.f32 %v286, %v292
    %296 = vst [vmem:[%s5] sm:$0xff] %v294
    %297 = vst [vmem:[%s5 + $0x8] sm:$0xff] %v295
    // Predicated region
    $region30: #{mlp_forward.1} parent=1 // pred_check
      _
    $region31: #{mlp_forward.1} parent=1 // pred_check_branch
      %299 = sbr.rel (0) target = $region33
    $region32: #{mlp_forward.1} parent=1 // pred_region
      _
    $region33: #{mlp_forward.1} parent=1 // pred_fallthru
      _
    // Predicated region
    $region34: #{mlp_forward.1} parent=1 // pred_check
      _
    $region35: #{mlp_forward.1} parent=1 // pred_check_branch
      %301 = sbr.rel (0) target = $region37
    $region36: #{mlp_forward.1} parent=1 // pred_region
      _
    $region37: #{mlp_forward.1} parent=1 // pred_fallthru
      _
    %302 = vsyncpa [#allocation4], 1
    %303 = vsyncpa [#allocation6], 1

</llo_original>
